<compile_context>
chip_gen: v6e
topology: v6e:2x2x1
jax: 0.10.0
libtpu: 0.0.40
codegen_flags: <defaults>
</compile_context>

<pallas_src>
import functools

import jax
import jax.numpy as jnp
from jax import lax
from jax.experimental import pallas as pl
from jax.experimental.pallas import tpu as pltpu


def _round_up(x, m):
    return ((x + m - 1) // m) * m


def _loss_kernel(blk, n_rows, use_bce_mask, eps, is_ragged,
                 tl_ref, tc_ref, hm_ref, tm_ref, tp_ref, tgp_ref,
                 out_ref,
                 cls_acc, dice_acc, bce_acc, prop_acc):
    k = pl.program_id(0)
    nk = pl.num_programs(0)
    f32 = jnp.float32

    @pl.when(k == 0)
    def _init():
        cls_acc[...] = jnp.zeros_like(cls_acc)
        dice_acc[...] = jnp.zeros_like(dice_acc)
        bce_acc[...] = jnp.zeros_like(bce_acc)
        prop_acc[...] = jnp.zeros_like(prop_acc)

    def _accumulate(valid):
        # valid is None (full block, no masking) or a (blk, 1) bool row mask.
        tl = tl_ref[...].astype(f32)    # track logits     (blk, C)
        tc = tc_ref[...].astype(f32)    # target cls       (blk, C)
        hm = hm_ref[...].astype(f32)    # hit-mask logits  (blk, H)
        tm = tm_ref[...].astype(f32)    # target masks     (blk, H)
        tp = tp_ref[...].astype(f32)    # track props      (blk, P)
        tgp = tgp_ref[...].astype(f32)  # target props     (blk, P)

        # ---- cls: BCE-with-logits (stable), partial sum ----
        cls_elem = (jnp.maximum(tl, 0.0) - tl * tc
                    + jnp.log1p(jnp.exp(-jnp.abs(tl))))
        if valid is not None:
            cls_elem = jnp.where(valid, cls_elem, 0.0)
        cls_acc[...] += jnp.sum(cls_elem, keepdims=True)          # (1,1)

        # ---- mask: sigmoid via shared exp(-|x|) + one approx reciprocal ----
        e = jnp.exp(-jnp.abs(hm))                  # exp(-|x|), shared by dice+bce
        inv = pl.reciprocal(1.0 + e, approx=True)  # 1/(1+e), single EUP vrcp
        probs = jnp.where(hm >= 0.0, inv, e * inv)  # == sigmoid(hm)

        num = 2.0 * jnp.sum(probs * tm, axis=1, keepdims=True)    # (blk,1)
        denom = jnp.sum(probs + tm, axis=1, keepdims=True) + eps
        dice_row = 1.0 - num * pl.reciprocal(denom, approx=True)
        if valid is not None:
            dice_row = jnp.where(valid, dice_row, 0.0)
        dice_acc[...] += jnp.sum(dice_row, keepdims=True)

        if use_bce_mask:
            # BCE(sigmoid(hm), tm) rewritten in logits form; reuses e.
            bce_elem = jnp.maximum(hm, 0.0) - hm * tm + jnp.log1p(e)
            if valid is not None:
                bce_elem = jnp.where(valid, bce_elem, 0.0)
            bce_acc[...] += jnp.sum(bce_elem, keepdims=True)

        # ---- prop: MSE partial sum ----
        diff = tp - tgp
        sq = diff * diff
        if valid is not None:
            sq = jnp.where(valid, sq, 0.0)
        prop_acc[...] += jnp.sum(sq, keepdims=True)

    if is_ragged:
        # Only the last block is partial: unmasked fast path for full blocks,
        # row-masked path only on the tail block.
        @pl.when(k != nk - 1)
        def _full():
            _accumulate(None)

        @pl.when(k == nk - 1)
        def _tail():
            row0 = k * blk
            row_ids = row0 + lax.broadcasted_iota(jnp.int32, (blk, 1), 0)
            _accumulate(row_ids < n_rows)
    else:
        _accumulate(None)

    # Pack the four accumulated sums into row 0, lanes 0..3 — once, at the end.
    @pl.when(k == nk - 1)
    def _finalize():
        sub = lax.broadcasted_iota(jnp.int32, (8, 128), 0)
        lane = lax.broadcasted_iota(jnp.int32, (8, 128), 1)
        first = sub == 0
        tile = (jnp.where(first & (lane == 0), cls_acc[...], 0.0)
                + jnp.where(first & (lane == 1), dice_acc[...], 0.0)
                + jnp.where(first & (lane == 2), bce_acc[...], 0.0)
                + jnp.where(first & (lane == 3), prop_acc[...], 0.0))
        out_ref[...] = tile


def loss_module_forward(track_logits, hit_masks, track_props,
                        target_cls, target_masks, target_props,
                        alpha=1000.0, beta=200.0, gamma=1.0,
                        use_bce_mask=True, eps=1e-6,
                        max_row_block=1024,
                        vmem_budget_bytes=12 * 1024 * 1024):
    n_rows, n_cls = track_logits.shape
    n_hits = hit_masks.shape[1]
    n_props = track_props.shape[1]
    feat = n_cls + n_hits + n_props

    # Row block sized against an explicit VMEM budget: double-buffered DMA of
    # six f32 arrays = 2 buffers * 4 B * 2*(C+H+P) bytes per row = 16*feat.
    blk = vmem_budget_bytes // (16 * feat)
    blk = min(blk, int(max_row_block), _round_up(n_rows, 8))
    blk = max(8, (blk // 8) * 8)

    total_blocks = (n_rows + blk - 1) // blk
    is_ragged = (n_rows % blk) != 0

    kernel = functools.partial(
        _loss_kernel, blk, int(n_rows), bool(use_bce_mask), float(eps),
        bool(is_ragged))

    def row_map(k):
        return (k, 0)

    grid_spec = pltpu.PrefetchScalarGridSpec(
        num_scalar_prefetch=0,
        grid=(total_blocks,),
        in_specs=[
            pl.BlockSpec((blk, n_cls), row_map),
            pl.BlockSpec((blk, n_cls), row_map),
            pl.BlockSpec((blk, n_hits), row_map),
            pl.BlockSpec((blk, n_hits), row_map),
            pl.BlockSpec((blk, n_props), row_map),
            pl.BlockSpec((blk, n_props), row_map),
        ],
        out_specs=pl.BlockSpec((8, 128), lambda k: (0, 0)),
        scratch_shapes=[pltpu.VMEM((1, 1), jnp.float32)] * 4,
    )

    cost = pl.CostEstimate(
        flops=int(12 * n_rows * feat),
        transcendentals=int((3 if use_bce_mask else 2) * n_rows * n_hits
                            + 2 * n_rows * n_cls),
        bytes_accessed=int(4 * 2 * n_rows * feat),
    )

    raw = pl.pallas_call(
        kernel,
        out_shape=jax.ShapeDtypeStruct((8, 128), jnp.float32),
        grid_spec=grid_spec,
        compiler_params=pltpu.CompilerParams(
            dimension_semantics=("arbitrary",),
            vmem_limit_bytes=32 * 1024 * 1024),
        cost_estimate=cost,
    )(track_logits, target_cls, hit_masks, target_masks,
      track_props, target_props)

    # Finalize means + alpha/beta/gamma weighting (cheap scalar work).
    sums = raw[0, :4]
    cls_mean = sums[0] / float(n_rows * n_cls)
    dice_mean = sums[1] / float(n_rows)
    prop_mean = sums[3] / float(n_rows * n_props)

    cls_w = alpha * cls_mean
    if use_bce_mask:
        bce_mean = sums[2] / float(n_rows * n_hits)
        mask_w = beta * (0.5 * dice_mean + 0.5 * bce_mean)
    else:
        mask_w = beta * dice_mean
    prop_w = gamma * prop_mean
    total = cls_w + mask_w + prop_w

    return {'total': total, 'cls': cls_w, 'mask': mask_w, 'param': prop_w}


def _reference(track_logits, hit_masks, track_props,
               target_cls, target_masks, target_props,
               alpha=1000.0, beta=200.0, gamma=1.0,
               use_bce_mask=True, eps=1e-6):
    # pure-jnp reference mirroring the PyTorch module
    cls_loss = jnp.mean(jnp.maximum(track_logits, 0.0)
                        - track_logits * target_cls
                        + jnp.log1p(jnp.exp(-jnp.abs(track_logits))))
    probs = jax.nn.sigmoid(hit_masks)
    num = 2.0 * jnp.sum(probs * target_masks, axis=1)
    denom = jnp.sum(probs + target_masks, axis=1) + eps
    dice = jnp.mean(1.0 - num / denom)
    if use_bce_mask:
        bce = jnp.mean(-(target_masks * jnp.maximum(jnp.log(probs), -100.0)
                         + (1.0 - target_masks)
                         * jnp.maximum(jnp.log(1.0 - probs), -100.0)))
        mask_loss = 0.5 * dice + 0.5 * bce
    else:
        mask_loss = dice
    prop_loss = jnp.mean((track_props - target_props) ** 2)
    return {
        'total': alpha * cls_loss + beta * mask_loss + gamma * prop_loss,
        'cls': alpha * cls_loss,
        'mask': beta * mask_loss,
        'param': gamma * prop_loss,
    }


def _check(out, ref):
    for k in ('total', 'cls', 'mask', 'param'):
        assert jnp.allclose(out[k], ref[k], rtol=2e-3, atol=2e-3), \
            (k, out[k], ref[k])


if __name__ == "__main__":
    key = jax.random.PRNGKey(0)

    # --- case A: small shapes, single full block ------------------------
    k1, k2, k3, k4, k5, k6, key = jax.random.split(key, 7)
    n_tracks, n_cls, n_hits, n_props = 8, 16, 128, 8
    track_logits = jax.random.normal(k1, (n_tracks, n_cls), jnp.float32)
    target_cls = jax.random.bernoulli(k2, 0.5, (n_tracks, n_cls)).astype(jnp.float32)
    hit_masks = jax.random.normal(k3, (n_tracks, n_hits), jnp.float32)
    target_masks = jax.random.uniform(k4, (n_tracks, n_hits), jnp.float32)
    track_props = jax.random.normal(k5, (n_tracks, n_props), jnp.float32)
    target_props = jax.random.normal(k6, (n_tracks, n_props), jnp.float32)

    out = loss_module_forward(track_logits, hit_masks, track_props,
                              target_cls, target_masks, target_props)
    out = jax.tree_util.tree_map(jax.block_until_ready, out)
    _check(out, _reference(track_logits, hit_masks, track_props,
                           target_cls, target_masks, target_props))

    # --- case B: non-multiple row count -> multi-block grid with ragged
    #             (masked) tail block (small max_row_block on purpose) ----
    k1, k2, k3, k4, k5, k6, key = jax.random.split(key, 7)
    n_tracks, n_cls, n_hits, n_props = 20, 16, 256, 8
    track_logits = jax.random.normal(k1, (n_tracks, n_cls), jnp.float32)
    target_cls = jax.random.bernoulli(k2, 0.5, (n_tracks, n_cls)).astype(jnp.float32)
    hit_masks = jax.random.normal(k3, (n_tracks, n_hits), jnp.float32)
    target_masks = jax.random.uniform(k4, (n_tracks, n_hits), jnp.float32)
    track_props = jax.random.normal(k5, (n_tracks, n_props), jnp.float32)
    target_props = jax.random.normal(k6, (n_tracks, n_props), jnp.float32)

    out_b = loss_module_forward(track_logits, hit_masks, track_props,
                                target_cls, target_masks, target_props,
                                max_row_block=8)
    out_b = jax.tree_util.tree_map(jax.block_until_ready, out_b)
    _check(out_b, _reference(track_logits, hit_masks, track_props,
                             target_cls, target_masks, target_props))

    # --- case C: dice-only mask-loss path (use_bce_mask=False) ----------
    out_c = loss_module_forward(track_logits, hit_masks, track_props,
                                target_cls, target_masks, target_props,
                                use_bce_mask=False, max_row_block=8)
    out_c = jax.tree_util.tree_map(jax.block_until_ready, out_c)
    _check(out_c, _reference(track_logits, hit_masks, track_props,
                             target_cls, target_masks, target_props,
                             use_bce_mask=False))

    print("KERNEL_OK")
</pallas_src>

<mosaic_0001>
module attributes {stable_mosaic.version = 11 : i64} {
  func.func @_loss_kernel(%arg0: i32, %arg1: memref<8x16xf32, #tpu.memory_space<vmem>>, %arg2: memref<8x16xf32, #tpu.memory_space<vmem>>, %arg3: memref<8x128xf32, #tpu.memory_space<vmem>>, %arg4: memref<8x128xf32, #tpu.memory_space<vmem>>, %arg5: memref<8x8xf32, #tpu.memory_space<vmem>>, %arg6: memref<8x8xf32, #tpu.memory_space<vmem>>, %arg7: memref<8x128xf32, #tpu.memory_space<vmem>>, %arg8: memref<1x1xf32, #tpu.memory_space<vmem>>, %arg9: memref<1x1xf32, #tpu.memory_space<vmem>>, %arg10: memref<1x1xf32, #tpu.memory_space<vmem>>, %arg11: memref<1x1xf32, #tpu.memory_space<vmem>>) attributes {dimension_semantics = [#tpu.dimension_semantics<arbitrary>], iteration_bounds = array<i64: 1>, scalar_prefetch = 0 : i64, scratch_operands = 4 : i64, tpu.core_type = #tpu.core_type<tc>, window_params = [{transform_indices = @transform_0, window_bounds = array<i64: 8, 16>}, {transform_indices = @transform_1, window_bounds = array<i64: 8, 16>}, {transform_indices = @transform_2, window_bounds = array<i64: 8, 128>}, {transform_indices = @transform_3, window_bounds = array<i64: 8, 128>}, {transform_indices = @transform_4, window_bounds = array<i64: 8, 8>}, {transform_indices = @transform_5, window_bounds = array<i64: 8, 8>}, {pipeline_mode = #tpu.pipeline_mode<synchronous>, transform_indices = @transform_6, window_bounds = array<i64: 8, 128>}]} {
    %c0_i32 = arith.constant 0 : i32
    %0 = arith.cmpi eq, %arg0, %c0_i32 : i32
    %1 = arith.extui %0 : i1 to i32
    %c0_i32_0 = arith.constant 0 : i32
    %2 = arith.cmpi ne, %1, %c0_i32_0 : i32
    scf.if %2 {
      %cst_44 = arith.constant 0.000000e+00 : f32
      %87 = vector.broadcast %cst_44 : f32 to vector<1x1xf32>
      %c0_45 = arith.constant 0 : index
      %c0_46 = arith.constant 0 : index
      %88 = vector.load %arg8[%c0_45, %c0_46] : memref<1x1xf32, #tpu.memory_space<vmem>>, vector<1x1xf32>
      tpu.vector_store %arg8[%c0_45, %c0_46], %87 {strides = array<i32>} : memref<1x1xf32, #tpu.memory_space<vmem>>, vector<1x1xf32>,
      %cst_47 = arith.constant 0.000000e+00 : f32
      %89 = vector.broadcast %cst_47 : f32 to vector<1x1xf32>
      %c0_48 = arith.constant 0 : index
      %c0_49 = arith.constant 0 : index
      %90 = vector.load %arg9[%c0_48, %c0_49] : memref<1x1xf32, #tpu.memory_space<vmem>>, vector<1x1xf32>
      tpu.vector_store %arg9[%c0_48, %c0_49], %89 {strides = array<i32>} : memref<1x1xf32, #tpu.memory_space<vmem>>, vector<1x1xf32>,
      %cst_50 = arith.constant 0.000000e+00 : f32
      %91 = vector.broadcast %cst_50 : f32 to vector<1x1xf32>
      %c0_51 = arith.constant 0 : index
      %c0_52 = arith.constant 0 : index
      %92 = vector.load %arg10[%c0_51, %c0_52] : memref<1x1xf32, #tpu.memory_space<vmem>>, vector<1x1xf32>
      tpu.vector_store %arg10[%c0_51, %c0_52], %91 {strides = array<i32>} : memref<1x1xf32, #tpu.memory_space<vmem>>, vector<1x1xf32>,
      %cst_53 = arith.constant 0.000000e+00 : f32
      %93 = vector.broadcast %cst_53 : f32 to vector<1x1xf32>
      %c0_54 = arith.constant 0 : index
      %c0_55 = arith.constant 0 : index
      %94 = vector.load %arg11[%c0_54, %c0_55] : memref<1x1xf32, #tpu.memory_space<vmem>>, vector<1x1xf32>
      tpu.vector_store %arg11[%c0_54, %c0_55], %93 {strides = array<i32>} : memref<1x1xf32, #tpu.memory_space<vmem>>, vector<1x1xf32>,
    } else {
    }
    %c0 = arith.constant 0 : index
    %c0_1 = arith.constant 0 : index
    %3 = vector.load %arg1[%c0, %c0_1] : memref<8x16xf32, #tpu.memory_space<vmem>>, vector<8x16xf32>
    %c0_2 = arith.constant 0 : index
    %c0_3 = arith.constant 0 : index
    %4 = vector.load %arg2[%c0_2, %c0_3] : memref<8x16xf32, #tpu.memory_space<vmem>>, vector<8x16xf32>
    %c0_4 = arith.constant 0 : index
    %c0_5 = arith.constant 0 : index
    %5 = vector.load %arg3[%c0_4, %c0_5] : memref<8x128xf32, #tpu.memory_space<vmem>>, vector<8x128xf32>
    %c0_6 = arith.constant 0 : index
    %c0_7 = arith.constant 0 : index
    %6 = vector.load %arg4[%c0_6, %c0_7] : memref<8x128xf32, #tpu.memory_space<vmem>>, vector<8x128xf32>
    %c0_8 = arith.constant 0 : index
    %c0_9 = arith.constant 0 : index
    %7 = vector.load %arg5[%c0_8, %c0_9] : memref<8x8xf32, #tpu.memory_space<vmem>>, vector<8x8xf32>
    %c0_10 = arith.constant 0 : index
    %c0_11 = arith.constant 0 : index
    %8 = vector.load %arg6[%c0_10, %c0_11] : memref<8x8xf32, #tpu.memory_space<vmem>>, vector<8x8xf32>
    %cst = arith.constant 0.000000e+00 : f32
    %9 = vector.broadcast %cst : f32 to vector<8x16xf32>
    %10 = arith.maximumf %3, %9 : vector<8x16xf32>
    %11 = arith.mulf %3, %4 : vector<8x16xf32>
    %12 = arith.subf %10, %11 : vector<8x16xf32>
    %13 = math.absf %3 : vector<8x16xf32>
    %cst_12 = arith.constant 0.000000e+00 : f32
    %14 = vector.broadcast %cst_12 : f32 to vector<8x16xf32>
    %15 = arith.subf %14, %13 : vector<8x16xf32>
    %16 = math.exp %15 : vector<8x16xf32>
    %17 = math.log1p %16 : vector<8x16xf32>
    %18 = arith.addf %12, %17 : vector<8x16xf32>
    %c0_13 = arith.constant 0 : index
    %c0_14 = arith.constant 0 : index
    %19 = vector.load %arg8[%c0_13, %c0_14] : memref<1x1xf32, #tpu.memory_space<vmem>>, vector<1x1xf32>
    %20 = vector.shape_cast %18 : vector<8x16xf32> to vector<1x8x16xf32>
    %cst_15 = arith.constant dense<0.000000e+00> : vector<1xf32>
    %21 = vector.multi_reduction <add>, %20, %cst_15 [1, 2] : vector<1x8x16xf32> to vector<1xf32>
    %22 = vector.shape_cast %21 : vector<1xf32> to vector<1x1x1xf32>
    %23 = vector.extract %22[0, 0, 0] : f32 from vector<1x1x1xf32>
    %24 = vector.broadcast %23 : f32 to vector<1x1xf32>
    %25 = arith.addf %19, %24 : vector<1x1xf32>
    %c0_16 = arith.constant 0 : index
    %c0_17 = arith.constant 0 : index
    %26 = vector.load %arg8[%c0_16, %c0_17] : memref<1x1xf32, #tpu.memory_space<vmem>>, vector<1x1xf32>
    tpu.vector_store %arg8[%c0_16, %c0_17], %25 {strides = array<i32>} : memref<1x1xf32, #tpu.memory_space<vmem>>, vector<1x1xf32>,
    %27 = math.absf %5 : vector<8x128xf32>
    %cst_18 = arith.constant 0.000000e+00 : f32
    %28 = vector.broadcast %cst_18 : f32 to vector<8x128xf32>
    %29 = arith.subf %28, %27 : vector<8x128xf32>
    %30 = math.exp %29 : vector<8x128xf32>
    %cst_19 = arith.constant 1.000000e+00 : f32
    %31 = vector.broadcast %cst_19 : f32 to vector<8x128xf32>
    %32 = arith.addf %31, %30 : vector<8x128xf32>
    %33 = tpu.reciprocal %32 {approx = true} : vector<8x128xf32> -> vector<8x128xf32>
    %cst_20 = arith.constant 0.000000e+00 : f32
    %34 = vector.broadcast %cst_20 : f32 to vector<8x128xf32>
    %35 = arith.cmpf oge, %5, %34 : vector<8x128xf32>
    %36 = arith.mulf %30, %33 : vector<8x128xf32>
    %37 = arith.select %35, %33, %36 : vector<8x128xi1>, vector<8x128xf32>
    %38 = arith.mulf %37, %6 : vector<8x128xf32>
    %cst_21 = arith.constant dense<0.000000e+00> : vector<8xf32>
    %39 = vector.multi_reduction <add>, %38, %cst_21 [1] : vector<8x128xf32> to vector<8xf32>
    %40 = vector.shape_cast %39 : vector<8xf32> to vector<8x1xf32>
    %cst_22 = arith.constant 2.000000e+00 : f32
    %41 = vector.broadcast %cst_22 : f32 to vector<8x1xf32>
    %42 = arith.mulf %41, %40 : vector<8x1xf32>
    %43 = arith.addf %37, %6 : vector<8x128xf32>
    %cst_23 = arith.constant dense<0.000000e+00> : vector<8xf32>
    %44 = vector.multi_reduction <add>, %43, %cst_23 [1] : vector<8x128xf32> to vector<8xf32>
    %45 = vector.shape_cast %44 : vector<8xf32> to vector<8x1xf32>
    %cst_24 = arith.constant 9.99999997E-7 : f32
    %46 = vector.broadcast %cst_24 : f32 to vector<8x1xf32>
    %47 = arith.addf %45, %46 : vector<8x1xf32>
    %48 = tpu.reciprocal %47 {approx = true} : vector<8x1xf32> -> vector<8x1xf32>
    %49 = arith.mulf %42, %48 : vector<8x1xf32>
    %cst_25 = arith.constant 1.000000e+00 : f32
    %50 = vector.broadcast %cst_25 : f32 to vector<8x1xf32>
    %51 = arith.subf %50, %49 : vector<8x1xf32>
    %c0_26 = arith.constant 0 : index
    %c0_27 = arith.constant 0 : index
    %52 = vector.load %arg9[%c0_26, %c0_27] : memref<1x1xf32, #tpu.memory_space<vmem>>, vector<1x1xf32>
    %53 = vector.shape_cast %51 : vector<8x1xf32> to vector<1x8x1xf32>
    %cst_28 = arith.constant dense<0.000000e+00> : vector<1xf32>
    %54 = vector.multi_reduction <add>, %53, %cst_28 [1, 2] : vector<1x8x1xf32> to vector<1xf32>
    %55 = vector.shape_cast %54 : vector<1xf32> to vector<1x1x1xf32>
    %56 = vector.extract %55[0, 0, 0] : f32 from vector<1x1x1xf32>
    %57 = vector.broadcast %56 : f32 to vector<1x1xf32>
    %58 = arith.addf %52, %57 : vector<1x1xf32>
    %c0_29 = arith.constant 0 : index
    %c0_30 = arith.constant 0 : index
    %59 = vector.load %arg9[%c0_29, %c0_30] : memref<1x1xf32, #tpu.memory_space<vmem>>, vector<1x1xf32>
    tpu.vector_store %arg9[%c0_29, %c0_30], %58 {strides = array<i32>} : memref<1x1xf32, #tpu.memory_space<vmem>>, vector<1x1xf32>,
    %cst_31 = arith.constant 0.000000e+00 : f32
    %60 = vector.broadcast %cst_31 : f32 to vector<8x128xf32>
    %61 = arith.maximumf %5, %60 : vector<8x128xf32>
    %62 = arith.mulf %5, %6 : vector<8x128xf32>
    %63 = arith.subf %61, %62 : vector<8x128xf32>
    %64 = math.log1p %30 : vector<8x128xf32>
    %65 = arith.addf %63, %64 : vector<8x128xf32>
    %c0_32 = arith.constant 0 : index
    %c0_33 = arith.constant 0 : index
    %66 = vector.load %arg10[%c0_32, %c0_33] : memref<1x1xf32, #tpu.memory_space<vmem>>, vector<1x1xf32>
    %67 = vector.shape_cast %65 : vector<8x128xf32> to vector<1x8x128xf32>
    %cst_34 = arith.constant dense<0.000000e+00> : vector<1xf32>
    %68 = vector.multi_reduction <add>, %67, %cst_34 [1, 2] : vector<1x8x128xf32> to vector<1xf32>
    %69 = vector.shape_cast %68 : vector<1xf32> to vector<1x1x1xf32>
    %70 = vector.extract %69[0, 0, 0] : f32 from vector<1x1x1xf32>
    %71 = vector.broadcast %70 : f32 to vector<1x1xf32>
    %72 = arith.addf %66, %71 : vector<1x1xf32>
    %c0_35 = arith.constant 0 : index
    %c0_36 = arith.constant 0 : index
    %73 = vector.load %arg10[%c0_35, %c0_36] : memref<1x1xf32, #tpu.memory_space<vmem>>, vector<1x1xf32>
    tpu.vector_store %arg10[%c0_35, %c0_36], %72 {strides = array<i32>} : memref<1x1xf32, #tpu.memory_space<vmem>>, vector<1x1xf32>,
    %74 = arith.subf %7, %8 : vector<8x8xf32>
    %75 = arith.mulf %74, %74 : vector<8x8xf32>
    %c0_37 = arith.constant 0 : index
    %c0_38 = arith.constant 0 : index
    %76 = vector.load %arg11[%c0_37, %c0_38] : memref<1x1xf32, #tpu.memory_space<vmem>>, vector<1x1xf32>
    %77 = vector.shape_cast %75 : vector<8x8xf32> to vector<1x8x8xf32>
    %cst_39 = arith.constant dense<0.000000e+00> : vector<1xf32>
    %78 = vector.multi_reduction <add>, %77, %cst_39 [1, 2] : vector<1x8x8xf32> to vector<1xf32>
    %79 = vector.shape_cast %78 : vector<1xf32> to vector<1x1x1xf32>
    %80 = vector.extract %79[0, 0, 0] : f32 from vector<1x1x1xf32>
    %81 = vector.broadcast %80 : f32 to vector<1x1xf32>
    %82 = arith.addf %76, %81 : vector<1x1xf32>
    %c0_40 = arith.constant 0 : index
    %c0_41 = arith.constant 0 : index
    %83 = vector.load %arg11[%c0_40, %c0_41] : memref<1x1xf32, #tpu.memory_space<vmem>>, vector<1x1xf32>
    tpu.vector_store %arg11[%c0_40, %c0_41], %82 {strides = array<i32>} : memref<1x1xf32, #tpu.memory_space<vmem>>, vector<1x1xf32>,
    %c0_i32_42 = arith.constant 0 : i32
    %84 = arith.cmpi eq, %arg0, %c0_i32_42 : i32
    %85 = arith.extui %84 : i1 to i32
    %c0_i32_43 = arith.constant 0 : i32
    %86 = arith.cmpi ne, %85, %c0_i32_43 : i32
    scf.if %86 {
      %87 = tpu.iota {dimensions = array<i32: 0>} : vector<8x128xi32>
      %88 = tpu.iota {dimensions = array<i32: 1>} : vector<8x128xi32>
      %c0_i32_44 = arith.constant 0 : i32
      %89 = vector.broadcast %c0_i32_44 : i32 to vector<8x128xi32>
      %90 = arith.cmpi eq, %87, %89 : vector<8x128xi32>
      %c0_i32_45 = arith.constant 0 : i32
      %91 = vector.broadcast %c0_i32_45 : i32 to vector<8x128xi32>
      %92 = arith.cmpi eq, %88, %91 : vector<8x128xi32>
      %93 = arith.andi %90, %92 : vector<8x128xi1>
      %c0_46 = arith.constant 0 : index
      %c0_47 = arith.constant 0 : index
      %94 = vector.load %arg8[%c0_46, %c0_47] : memref<1x1xf32, #tpu.memory_space<vmem>>, vector<1x1xf32>
      %cst_48 = arith.constant 0.000000e+00 : f32
      %95 = vector.shape_cast %94 : vector<1x1xf32> to vector<1x1xf32>
      %96 = vector.broadcast %95 : vector<1x1xf32> to vector<8x128xf32>
      %97 = vector.broadcast %cst_48 : f32 to vector<8x128xf32>
      %98 = arith.select %93, %96, %97 : vector<8x128xi1>, vector<8x128xf32>
      %c1_i32 = arith.constant 1 : i32
      %99 = vector.broadcast %c1_i32 : i32 to vector<8x128xi32>
      %100 = arith.cmpi eq, %88, %99 : vector<8x128xi32>
      %101 = arith.andi %90, %100 : vector<8x128xi1>
      %c0_49 = arith.constant 0 : index
      %c0_50 = arith.constant 0 : index
      %102 = vector.load %arg9[%c0_49, %c0_50] : memref<1x1xf32, #tpu.memory_space<vmem>>, vector<1x1xf32>
      %cst_51 = arith.constant 0.000000e+00 : f32
      %103 = vector.shape_cast %102 : vector<1x1xf32> to vector<1x1xf32>
      %104 = vector.broadcast %103 : vector<1x1xf32> to vector<8x128xf32>
      %105 = vector.broadcast %cst_51 : f32 to vector<8x128xf32>
      %106 = arith.select %101, %104, %105 : vector<8x128xi1>, vector<8x128xf32>
      %107 = arith.addf %98, %106 : vector<8x128xf32>
      %c2_i32 = arith.constant 2 : i32
      %108 = vector.broadcast %c2_i32 : i32 to vector<8x128xi32>
      %109 = arith.cmpi eq, %88, %108 : vector<8x128xi32>
      %110 = arith.andi %90, %109 : vector<8x128xi1>
      %c0_52 = arith.constant 0 : index
      %c0_53 = arith.constant 0 : index
      %111 = vector.load %arg10[%c0_52, %c0_53] : memref<1x1xf32, #tpu.memory_space<vmem>>, vector<1x1xf32>
      %cst_54 = arith.constant 0.000000e+00 : f32
      %112 = vector.shape_cast %111 : vector<1x1xf32> to vector<1x1xf32>
      %113 = vector.broadcast %112 : vector<1x1xf32> to vector<8x128xf32>
      %114 = vector.broadcast %cst_54 : f32 to vector<8x128xf32>
      %115 = arith.select %110, %113, %114 : vector<8x128xi1>, vector<8x128xf32>
      %116 = arith.addf %107, %115 : vector<8x128xf32>
      %c3_i32 = arith.constant 3 : i32
      %117 = vector.broadcast %c3_i32 : i32 to vector<8x128xi32>
      %118 = arith.cmpi eq, %88, %117 : vector<8x128xi32>
      %119 = arith.andi %90, %118 : vector<8x128xi1>
      %c0_55 = arith.constant 0 : index
      %c0_56 = arith.constant 0 : index
      %120 = vector.load %arg11[%c0_55, %c0_56] : memref<1x1xf32, #tpu.memory_space<vmem>>, vector<1x1xf32>
      %cst_57 = arith.constant 0.000000e+00 : f32
      %121 = vector.shape_cast %120 : vector<1x1xf32> to vector<1x1xf32>
      %122 = vector.broadcast %121 : vector<1x1xf32> to vector<8x128xf32>
      %123 = vector.broadcast %cst_57 : f32 to vector<8x128xf32>
      %124 = arith.select %119, %122, %123 : vector<8x128xi1>, vector<8x128xf32>
      %125 = arith.addf %116, %124 : vector<8x128xf32>
      %c0_58 = arith.constant 0 : index
      %c0_59 = arith.constant 0 : index
      %126 = vector.load %arg7[%c0_58, %c0_59] : memref<8x128xf32, #tpu.memory_space<vmem>>, vector<8x128xf32>
      tpu.vector_store %arg7[%c0_58, %c0_59], %125 {strides = array<i32>} : memref<8x128xf32, #tpu.memory_space<vmem>>, vector<8x128xf32>,
    } else {
    }
    return
  }
  func.func @transform_0(%arg0: i32) -> (i32, i32) {
    %c0_i32 = arith.constant 0 : i32
    %c0_i32_0 = arith.constant 0 : i32
    return %arg0, %c0_i32 : i32, i32
  }
  func.func @transform_1(%arg0: i32) -> (i32, i32) {
    %c0_i32 = arith.constant 0 : i32
    %c0_i32_0 = arith.constant 0 : i32
    return %arg0, %c0_i32 : i32, i32
  }
  func.func @transform_2(%arg0: i32) -> (i32, i32) {
    %c0_i32 = arith.constant 0 : i32
    %c0_i32_0 = arith.constant 0 : i32
    return %arg0, %c0_i32 : i32, i32
  }
  func.func @transform_3(%arg0: i32) -> (i32, i32) {
    %c0_i32 = arith.constant 0 : i32
    %c0_i32_0 = arith.constant 0 : i32
    return %arg0, %c0_i32 : i32, i32
  }
  func.func @transform_4(%arg0: i32) -> (i32, i32) {
    %c0_i32 = arith.constant 0 : i32
    %c0_i32_0 = arith.constant 0 : i32
    return %arg0, %c0_i32 : i32, i32
  }
  func.func @transform_5(%arg0: i32) -> (i32, i32) {
    %c0_i32 = arith.constant 0 : i32
    %c0_i32_0 = arith.constant 0 : i32
    return %arg0, %c0_i32 : i32, i32
  }
  func.func @transform_6(%arg0: i32) -> (i32, i32) {
    %c0_i32 = arith.constant 0 : i32
    %c0_i32_0 = arith.constant 0 : i32
    %c0_i32_1 = arith.constant 0 : i32
    return %c0_i32, %c0_i32_0 : i32, i32
  }
}

</mosaic_0001>

<llo_original>
// kernel: tpu_custom_call.1
$region0: #{tpu_custom_call.1}
  #allocation0 [shape = 'u32[]', space=smem, size = 0x4, offset = 0x4, fixed_abs, tag = 'smem constant byte address 0x4 - core index']
  #allocation1 [shape = 'u32[144,128]{1,0:T(1,128)}', space=vmem, size = 0x12000, scoped, tag = 'internal scratch']
  #allocation2 [shape = 'f32[1,1]{1,0:T(1,128)}', space=vmem, size = 0x200, scoped, tag = 'scratch operand']
  #allocation3 [shape = 'f32[1,1]{1,0:T(1,128)}', space=vmem, size = 0x200, scoped, tag = 'scratch operand']
  #allocation4 [shape = 'f32[1,1]{1,0:T(1,128)}', space=vmem, size = 0x200, scoped, tag = 'scratch operand']
  #allocation5 [shape = 'f32[1,1]{1,0:T(1,128)}', space=vmem, size = 0x200, scoped, tag = 'scratch operand']
  %s0 = inlined_call_operand.hbm [shape: f32[8,16], index: 0, kind: input, shape index: {}]
  %s1 = inlined_call_operand.hbm [shape: f32[8,16], index: 1, kind: input, shape index: {}]
  %s2 = inlined_call_operand.hbm [shape: f32[8,128], index: 2, kind: input, shape index: {}]
  %s3 = inlined_call_operand.hbm [shape: f32[8,128], index: 3, kind: input, shape index: {}]
  %s4 = inlined_call_operand.hbm [shape: f32[8,8], index: 4, kind: input, shape index: {}]
  %s5 = inlined_call_operand.vmem [shape: f32[8,8], index: 5, kind: input, shape index: {}]
  %s6 = inlined_call_operand.hbm [shape: f32[8,128], index: 6, kind: output, shape index: {}]
  %s7 = sld [smem:[#allocation0]]
  $region62: #{tpu_custom_call.1} parent=0
    _
  %s9 = ssub.s32 1, %s7
  %s10 = scalar_select 0, %s9, %s7
  $region1: #{tpu_custom_call.1} parent=0
    #allocation6 [shape = 'u8[4096]{0}', space=vmem, size = 0x1000, scoped, tag = 'input window, operand 0, single buffered']
    #allocation7 [shape = 's32[1]{0}', space=sflag, size = 0x4, scoped, tag = 'scoped memory for tpu_custom_call.1']
    #allocation8 [shape = 's32[1]{0}', space=sflag, size = 0x4, scoped, tag = 'scoped memory for tpu_custom_call.1']
    #allocation9 [shape = 'u8[4096]{0}', space=vmem, size = 0x1000, scoped, tag = 'input window, operand 1, single buffered']
    #allocation10 [shape = 's32[1]{0}', space=sflag, size = 0x4, scoped, tag = 'scoped memory for tpu_custom_call.1']
    #allocation11 [shape = 'u8[4096]{0}', space=vmem, size = 0x1000, scoped, tag = 'input window, operand 2, single buffered']
    #allocation12 [shape = 'u8[4096]{0}', space=vmem, size = 0x1000, scoped, tag = 'input window, operand 3, single buffered']
    #allocation13 [shape = 's32[1]{0}', space=sflag, size = 0x4, scoped, tag = 'scoped memory for tpu_custom_call.1']
    #allocation14 [shape = 'u8[4096]{0}', space=vmem, size = 0x1000, scoped, tag = 'input window, operand 4, single buffered']
    #allocation15 [shape = 'u8[4096]{0}', space=vmem, size = 0x1000, scoped, tag = 'output window, operand 0, single buffered']
    %11 = vsyncpa [#allocation7], 0
    %12 = vsyncpa [#allocation10], 0
    %13 = vsyncpa [#allocation13], 0
    %14 = vsyncpa [#allocation8], 0
    // Predicated region
    $region2: #{tpu_custom_call.1} parent=1 // pred_check
      _
    $region3: #{tpu_custom_call.1} parent=1 // pred_check_branch
      %16 = sbr.rel (0) target = $region5
    $region4: #{tpu_custom_call.1} parent=1 // pred_region
      %s18 = ssub.s32 128, 128
      %19 = vsyncadd [#allocation7], %s18
      %s21 = sshll.u32 [#allocation6], 4
      %s22 = int_to_ptr.vmem [resolvable:$true] %s21
      %24 = dma.hbm_to_vmem [thread:$0]  %s0, 128, %s22, [#allocation7]
    $region5: #{tpu_custom_call.1} parent=1 // pred_fallthru
      _
    // Predicated region
    $region6: #{tpu_custom_call.1} parent=1 // pred_check
      _
    $region7: #{tpu_custom_call.1} parent=1 // pred_check_branch
      %26 = sbr.rel (0) target = $region9
    $region8: #{tpu_custom_call.1} parent=1 // pred_region
      %s28 = ssub.s32 128, 128
      %29 = vsyncadd [#allocation10], %s28
      %s31 = sshll.u32 [#allocation9], 4
      %s32 = int_to_ptr.vmem [resolvable:$true] %s31
      %34 = dma.hbm_to_vmem [thread:$0]  %s1, 128, %s32, [#allocation10]
    $region9: #{tpu_custom_call.1} parent=1 // pred_fallthru
      _
    // Predicated region
    $region10: #{tpu_custom_call.1} parent=1 // pred_check
      _
    $region11: #{tpu_custom_call.1} parent=1 // pred_check_branch
      %36 = sbr.rel (0) target = $region13
    $region12: #{tpu_custom_call.1} parent=1 // pred_region
      %s38 = ssub.s32 128, 128
      %39 = vsyncadd [#allocation10], %s38
      %s41 = sshll.u32 [#allocation11], 4
      %s42 = int_to_ptr.vmem [resolvable:$true] %s41
      %44 = dma.hbm_to_vmem [thread:$0]  %s2, 128, %s42, [#allocation10]
    $region13: #{tpu_custom_call.1} parent=1 // pred_fallthru
      _
    // Predicated region
    $region14: #{tpu_custom_call.1} parent=1 // pred_check
      _
    $region15: #{tpu_custom_call.1} parent=1 // pred_check_branch
      %46 = sbr.rel (0) target = $region17
    $region16: #{tpu_custom_call.1} parent=1 // pred_region
      %s48 = ssub.s32 128, 128
      %49 = vsyncadd [#allocation13], %s48
      %s51 = sshll.u32 [#allocation12], 4
      %s52 = int_to_ptr.vmem [resolvable:$true] %s51
      %54 = dma.hbm_to_vmem [thread:$0]  %s3, 128, %s52, [#allocation13]
    $region17: #{tpu_custom_call.1} parent=1 // pred_fallthru
      _
    // Predicated region
    $region18: #{tpu_custom_call.1} parent=1 // pred_check
      _
    $region19: #{tpu_custom_call.1} parent=1 // pred_check_branch
      %56 = sbr.rel (0) target = $region21
    $region20: #{tpu_custom_call.1} parent=1 // pred_region
      %s58 = ssub.s32 128, 128
      %59 = vsyncadd [#allocation13], %s58
      %s61 = sshll.u32 [#allocation14], 4
      %s62 = int_to_ptr.vmem [resolvable:$true] %s61
      %64 = dma.hbm_to_vmem [thread:$0]  %s4, 128, %s62, [#allocation13]
    $region21: #{tpu_custom_call.1} parent=1 // pred_fallthru
      _
    // Predicated region
    $region22: #{tpu_custom_call.1} parent=1 // pred_check
      _
    $region23: #{tpu_custom_call.1} parent=1 // pred_check_branch
      %66 = sbr.rel (0) target = $region25
    $region24: #{tpu_custom_call.1} parent=1 // pred_region
      _
    $region25: #{tpu_custom_call.1} parent=1 // pred_fallthru
      _
    // Predicated region
    $region26: #{tpu_custom_call.1} parent=1 // pred_check
      _
    $region27: #{tpu_custom_call.1} parent=1 // pred_check_branch
      %68 = sbr.rel (0) target = $region29
    $region28: #{tpu_custom_call.1} parent=1 // pred_region
      %69 = dma.done [#allocation7], 128
    $region29: #{tpu_custom_call.1} parent=1 // pred_fallthru
      _
    // Predicated region
    $region30: #{tpu_custom_call.1} parent=1 // pred_check
      _
    $region31: #{tpu_custom_call.1} parent=1 // pred_check_branch
      %71 = sbr.rel (0) target = $region33
    $region32: #{tpu_custom_call.1} parent=1 // pred_region
      %72 = dma.done [#allocation10], 128
    $region33: #{tpu_custom_call.1} parent=1 // pred_fallthru
      _
    // Predicated region
    $region34: #{tpu_custom_call.1} parent=1 // pred_check
      _
    $region35: #{tpu_custom_call.1} parent=1 // pred_check_branch
      %74 = sbr.rel (0) target = $region37
    $region36: #{tpu_custom_call.1} parent=1 // pred_region
      %75 = dma.done [#allocation10], 128
    $region37: #{tpu_custom_call.1} parent=1 // pred_fallthru
      _
    // Predicated region
    $region38: #{tpu_custom_call.1} parent=1 // pred_check
      _
    $region39: #{tpu_custom_call.1} parent=1 // pred_check_branch
      %77 = sbr.rel (0) target = $region41
    $region40: #{tpu_custom_call.1} parent=1 // pred_region
      %78 = dma.done [#allocation13], 128
    $region41: #{tpu_custom_call.1} parent=1 // pred_fallthru
      _
    // Predicated region
    $region42: #{tpu_custom_call.1} parent=1 // pred_check
      _
    $region43: #{tpu_custom_call.1} parent=1 // pred_check_branch
      %80 = sbr.rel (0) target = $region45
    $region44: #{tpu_custom_call.1} parent=1 // pred_region
      %81 = dma.done [#allocation13], 128
    $region45: #{tpu_custom_call.1} parent=1 // pred_fallthru
      _
    %p82 = scmp.eq.s32.totalorder 0, 0
    // Predicated region
    $region46: #{tpu_custom_call.1} parent=1 // pred_check
      %p83 = pneg %p82
    $region47: #{tpu_custom_call.1} parent=1 // pred_check_branch
      %85 = sbr.rel (%p83) target = $region49
    $region48: #{tpu_custom_call.1} parent=1 // pred_region
      %vm86 = vcmask 0
      %87 = vst.msk [vmem:[#allocation2] sm:$0x1] %vm86, 0.0
      %88 = vst.msk [vmem:[#allocation3] sm:$0x1] %vm86, 0.0
      %89 = vst.msk [vmem:[#allocation4] sm:$0x1] %vm86, 0.0
      %90 = vst.msk [vmem:[#allocation5] sm:$0x1] %vm86, 0.0
    $region49: #{tpu_custom_call.1} parent=1 // pred_fallthru
      _
    %v91 = vld [vmem:[#allocation6] sm:$0xff]
    %v92 = vld [vmem:[#allocation9] sm:$0xff]
    %v93 = vld [vmem:[#allocation11] sm:$0xff]
    %v94 = vld [vmem:[#allocation12] sm:$0xff]
    %v95 = vld [vmem:[#allocation14] sm:$0xff]
    %v96 = vld [vmem:[%s5] sm:$0xff]
    %v97 = vmax.f32 %v91, 0.0
    %v98 = vmul.f32 %v91, %v92
    %v99 = vsub.f32 %v97, %v98
    %v100 = vand.u32 2147483647, %v91
    %v101 = vsub.f32 0.0, %v100
    %v102 = vmul.f32 %v101, 1.442695
    %v103 = vpow.pop %v102
    %v104 = vadd.f32 %v103, 1.0
    %v105 = vlog2.pop %v104
    %v106 = vmul.f32 %v105, 0.6931472
    %v107 = vmul.f32 -0.5, %v103
    %v108 = vadd.f32 %v107, 1.0
    %v109 = vmul.f32 %v108, %v103
    %v110 = vand.u32 2147483647, %v103
    %vm111 = vcmp.lt.f32.partialorder %v110, 0.0004427343
    %v112 = vsel %vm111, %v109, %v106
    %v113 = vadd.f32 %v99, %v112
    %v114 = vld [vmem:[#allocation2] sm:$0x1]
    %vm115 = vcmask 130048
    %v116 = vsel %vm115, %v113, 0.0
    %117 = vadd.xlane.f32.xlu0 %v116
    %v118 = vpop.xlane.xlu0 %117
    %v119 = vrot.slane %v118, 4
    %v120 = vadd.f32 %v118, %v119
    %v121 = vrot.slane %v120, 2
    %v122 = vadd.f32 %v120, %v121
    %v123 = vrot.slane %v122, 1
    %v124 = vadd.f32 %v122, %v123
    %s125 = vtos %v124
    %v126 = vstv %s125
    %v127 = vadd.f32 %v114, %v126
    %vm128 = vcmask 0
    %129 = vst.msk [vmem:[#allocation2] sm:$0x1] %vm128, %v127
    %v130 = vand.u32 2147483647, %v93
    %v131 = vsub.f32 0.0, %v130
    %v132 = vmul.f32 %v131, 1.442695
    %v133 = vpow.pop %v132
    %v134 = vadd.f32 %v133, 1.0
    %v135 = vrcp.pop %v134
    %vm136 = vcmp.ge.f32.partialorder %v93, 0.0
    %v137 = vmul.f32 %v133, %v135
    %v138 = vsel %vm136, %v135, %v137
    %v139 = vmul.f32 %v138, %v94
    %140 = vadd.xlane.f32.xlu0 %v139
    %v141 = vpop.xlane.xlu0 %140
    %v142 = vmul.f32 %v141, 2.0
    %v143 = vadd.f32 %v138, %v94
    %144 = vadd.xlane.f32.xlu0 %v143
    %v145 = vpop.xlane.xlu0 %144
    %v146 = vadd.f32 %v145, 1e-06
    %v147 = vrcp.pop %v146
    %v148 = vmul.f32 %v142, %v147
    %v149 = vsub.f32 1.0, %v148
    %v150 = vld [vmem:[#allocation3] sm:$0x1]
    %vm151 = vcmask 7168
    %v152 = vsel %vm151, %v149, 0.0
    %153 = vadd.xlane.f32.xlu0 %v152
    %v154 = vpop.xlane.xlu0 %153
    %v155 = vrot.slane %v154, 4
    %v156 = vadd.f32 %v154, %v155
    %v157 = vrot.slane %v156, 2
    %v158 = vadd.f32 %v156, %v157
    %v159 = vrot.slane %v158, 1
    %v160 = vadd.f32 %v158, %v159
    %s161 = vtos %v160
    %v162 = vstv %s161
    %v163 = vadd.f32 %v150, %v162
    %164 = vst.msk [vmem:[#allocation3] sm:$0x1] %vm128, %v163
    %v165 = vmax.f32 %v93, 0.0
    %v166 = vmul.f32 %v93, %v94
    %v167 = vsub.f32 %v165, %v166
    %v168 = vadd.f32 %v133, 1.0
    %v169 = vlog2.pop %v168
    %v170 = vmul.f32 %v169, 0.6931472
    %v171 = vmul.f32 -0.5, %v133
    %v172 = vadd.f32 %v171, 1.0
    %v173 = vmul.f32 %v172, %v133
    %v174 = vand.u32 2147483647, %v133
    %vm175 = vcmp.lt.f32.partialorder %v174, 0.0004427343
    %v176 = vsel %vm175, %v173, %v170
    %v177 = vadd.f32 %v167, %v176
    %v178 = vld [vmem:[#allocation4] sm:$0x1]
    %179 = vadd.xlane.f32.xlu0 %v177
    %v180 = vpop.xlane.xlu0 %179
    %v181 = vrot.slane %v180, 4
    %v182 = vadd.f32 %v180, %v181
    %v183 = vrot.slane %v182, 2
    %v184 = vadd.f32 %v182, %v183
    %v185 = vrot.slane %v184, 1
    %v186 = vadd.f32 %v184, %v185
    %s187 = vtos %v186
    %v188 = vstv %s187
    %v189 = vadd.f32 %v178, %v188
    %190 = vst.msk [vmem:[#allocation4] sm:$0x1] %vm128, %v189
    %v191 = vsub.f32 %v95, %v96
    %v192 = vmul.f32 %v191, %v191
    %v193 = vld [vmem:[#allocation5] sm:$0x1]
    %vm194 = vcmask 64512
    %v195 = vsel %vm194, %v192, 0.0
    %196 = vadd.xlane.f32.xlu0 %v195
    %v197 = vpop.xlane.xlu0 %196
    %v198 = vrot.slane %v197, 4
    %v199 = vadd.f32 %v197, %v198
    %v200 = vrot.slane %v199, 2
    %v201 = vadd.f32 %v199, %v200
    %v202 = vrot.slane %v201, 1
    %v203 = vadd.f32 %v201, %v202
    %s204 = vtos %v203
    %v205 = vstv %s204
    %v206 = vadd.f32 %v193, %v205
    %207 = vst.msk [vmem:[#allocation5] sm:$0x1] %vm128, %v206
    // Predicated region
    $region50: #{tpu_custom_call.1} parent=1 // pred_check
      %p208 = pneg %p82
    $region51: #{tpu_custom_call.1} parent=1 // pred_check_branch
      %210 = sbr.rel (%p208) target = $region53
    $region52: #{tpu_custom_call.1} parent=1 // pred_region
      %v211 = vlaneseq
      %v212 = vshrl.u32 %v211, 7
      %v213 = vlaneseq
      %v214 = vand.u32 %v213, 127
      %vm215 = vcmp.eq.s32.totalorder %v212, 0
      %vm216 = vcmp.eq.s32.totalorder %v214, 0
      %vm217 = vmand %vm215, %vm216
      %v218 = vld [vmem:[#allocation2] sm:$0x1]
      %v220 = vlaneseq
      %v221 = vshrl.u32 %v220, 7
      %v222 = vsub.s32 0, %v221
      %v223 = vrot.slane %v218, %v222
      %224 = vset.pattern.permute.xlu0 0
      %225 = vperm.xlu0 %224, %v223
      %v226 = vpop.permute.xlu0 %225
      %v228 = vsel %vm217, %v226, 0.0
      %vm229 = vcmp.eq.s32.totalorder %v214, 1
      %vm230 = vmand %vm215, %vm229
      %v231 = vld [vmem:[#allocation3] sm:$0x1]
      %v233 = vlaneseq
      %v234 = vshrl.u32 %v233, 7
      %v235 = vsub.s32 0, %v234
      %v236 = vrot.slane %v231, %v235
      %237 = vset.pattern.permute.xlu0 0
      %238 = vperm.xlu0 %237, %v236
      %v239 = vpop.permute.xlu0 %238
      %v241 = vsel %vm230, %v239, 0.0
      %v242 = vadd.f32 %v228, %v241
      %vm243 = vcmp.eq.s32.totalorder %v214, 2
      %vm244 = vmand %vm215, %vm243
      %v245 = vld [vmem:[#allocation4] sm:$0x1]
      %v247 = vlaneseq
      %v248 = vshrl.u32 %v247, 7
      %v249 = vsub.s32 0, %v248
      %v250 = vrot.slane %v245, %v249
      %251 = vset.pattern.permute.xlu0 0
      %252 = vperm.xlu0 %251, %v250
      %v253 = vpop.permute.xlu0 %252
      %v255 = vsel %vm244, %v253, 0.0
      %v256 = vadd.f32 %v242, %v255
      %vm257 = vcmp.eq.s32.totalorder %v214, 3
      %vm258 = vmand %vm215, %vm257
      %v259 = vld [vmem:[#allocation5] sm:$0x1]
      %v261 = vlaneseq
      %v262 = vshrl.u32 %v261, 7
      %v263 = vsub.s32 0, %v262
      %v264 = vrot.slane %v259, %v263
      %265 = vset.pattern.permute.xlu0 0
      %266 = vperm.xlu0 %265, %v264
      %v267 = vpop.permute.xlu0 %266
      %v269 = vsel %vm258, %v267, 0.0
      %v270 = vadd.f32 %v256, %v269
      %271 = vst [vmem:[#allocation15] sm:$0xff] %v270
    $region53: #{tpu_custom_call.1} parent=1 // pred_fallthru
      _
    // Predicated region
    $region54: #{tpu_custom_call.1} parent=1 // pred_check
      _
    $region55: #{tpu_custom_call.1} parent=1 // pred_check_branch
      %273 = sbr.rel (0) target = $region57
    $region56: #{tpu_custom_call.1} parent=1 // pred_region
      %s275 = ssub.s32 128, 128
      %276 = vsyncadd [#allocation8], %s275
      %s278 = sshll.u32 [#allocation15], 4
      %s279 = int_to_ptr.vmem [resolvable:$true] %s278
      %281 = dma.vmem_to_hbm [thread:$0]  %s279, 128, %s6, [#allocation8]
    $region57: #{tpu_custom_call.1} parent=1 // pred_fallthru
      _
    // Predicated region
    $region58: #{tpu_custom_call.1} parent=1 // pred_check
      _
    $region59: #{tpu_custom_call.1} parent=1 // pred_check_branch
      %283 = sbr.rel (0) target = $region61
    $region60: #{tpu_custom_call.1} parent=1 // pred_region
      %284 = dma.done [#allocation8], 128
    $region61: #{tpu_custom_call.1} parent=1 // pred_fallthru
      _
    %285 = vsyncpa [#allocation7], 1
    %286 = vsyncpa [#allocation10], 1
    %287 = vsyncpa [#allocation13], 1
    %288 = vsyncpa [#allocation8], 1

</llo_original>
